<compile_context>
chip_gen: v5e
topology: v5e:2x2
jax: 0.10.0
libtpu: 0.0.40
codegen_flags: <defaults>
</compile_context>

<pallas_src>
import functools

import jax
import jax.numpy as jnp
from jax.experimental import pallas as pl
from jax.experimental.pallas import tpu as pltpu


# Generation-safe streaming budget:
#   ~12 MiB per input buffer, double-buffered -> ~24 MiB of streaming VMEM.
#   vmem_limit_bytes = 40 MiB: above the default scoped limits (16 MiB v5e /
#   32 MiB v6e+v7x) so the big tiles actually pipeline, and well below v7x's
#   64 MiB physical VMEM.
_TARGET_TILE_BYTES = 12 << 20
_VMEM_LIMIT_BYTES = 40 << 20


def _pick_tile(total, bytes_per_unit, target_bytes, align):
    """Largest `align`-multiple tile (units of the grid-tiled axis) that fits the
    byte budget.  Prefers an exact divisor of `total` (so the ragged-tile mask
    path is never emitted) as long as it costs at most 2x more grid steps."""
    if total * bytes_per_unit <= target_bytes or total <= align:
        return total                                   # full extent: always legal
    t = min(total, max(1, target_bytes // bytes_per_unit))
    t = max(align, (t // align) * align)
    if total % t != 0:
        cand = t
        while cand >= max(align, t // 2):
            if total % cand == 0:
                return cand
            cand -= align
    return t


def _cab_kernel(x_ref, w1_ref, w2_ref, o_ref, sum_sc, max_sc, *,
                n_valid, blk, inv_hw):
    # x_ref : (1, C, blk) or (1, C, blk, 128)  one batch element, one spatial tile
    # w1_ref: (R, C)       fc1 weight, native layout (resident, DMA'd once)
    # w2_ref: (C_out, R)   fc2 weight, native layout (resident, DMA'd once)
    # o_ref : (1, 1, C_out)  sigmoid(channel attention) for this batch element
    # sum_sc/max_sc: (1, C) f32 running spatial sum / max (persist across tiles)
    t = pl.program_id(1)

    x_native = x_ref[0]                          # (C, blk[, 128]) native dtype
    x_sum = x_native.astype(jnp.float32)         # mean path accumulates in f32
    x_max = x_native                             # max path stays in native dtype

    if n_valid % blk != 0:      # static: ragged-tile mask only emitted if needed
        idx = jax.lax.broadcasted_iota(jnp.int32, x_native.shape, 1)
        valid = (t * blk + idx) < n_valid
        x_sum = jnp.where(valid, x_sum, 0.0)
        x_max = jnp.where(valid, x_max, -jnp.inf)

    # Reduce every non-channel axis (lane reduce, plus a sublane reduce in the
    # sublane-dense 4-D layout).  These run on the XLU and hide under the DMA.
    psum = x_sum
    pmax = x_max
    for _ in range(x_native.ndim - 1):
        psum = jnp.sum(psum, axis=-1)
        pmax = jnp.max(pmax, axis=-1)
    psum = psum[None, :]                                   # (1, C) f32
    pmax = pmax.astype(jnp.float32)[None, :]               # (1, C) f32

    @pl.when(t == 0)
    def _():
        sum_sc[...] = psum
        max_sc[...] = pmax

    @pl.when(t > 0)
    def _():
        sum_sc[...] = sum_sc[...] + psum
        max_sc[...] = jnp.maximum(max_sc[...], pmax)

    # Fused epilogue on the last spatial tile: channel MLP + sigmoid.
    @pl.when(t == pl.num_programs(1) - 1)
    def _():
        avg = sum_sc[...] * inv_hw                         # (1, C)
        mx = max_sc[...]                                   # (1, C)
        w1 = w1_ref[...].astype(jnp.float32)               # (R, C)
        w2 = w2_ref[...].astype(jnp.float32)               # (C_out, R)
        # fc1 + relu for both branches; fc2 is linear and bias-free, so both
        # branches share a single fc2 contraction (only valid with no fc2 bias).
        h = (jnp.maximum(jnp.sum(avg * w1, axis=-1), 0.0)
             + jnp.maximum(jnp.sum(mx * w1, axis=-1), 0.0))          # (R,)
        y = jnp.sum(w2 * h, axis=-1)                                 # (C_out,)
        o_ref[...] = jax.nn.sigmoid(y)[None, None, :].astype(o_ref.dtype)


def cab_forward(x_nchw, w_fc1, w_fc2):
    """CAB forward.  x_nchw: (B, C, H, W); w_fc1: (R, C); w_fc2: (C_out, R).
    Returns sigmoid channel attention of shape (B, C_out, 1, 1)."""
    B, C, H, W = x_nchw.shape
    R = w_fc1.shape[0]
    C_out = w_fc2.shape[0]
    HW = H * W
    itemsize = jnp.dtype(x_nchw.dtype).itemsize

    # Zero-copy reshape only; pick the densest legal layout.
    if HW % 128 == 0:
        # Spatial fills both sublanes and lanes -> dense vregs even for C < 8.
        S = HW // 128
        x = x_nchw.reshape(B, C, S, 128)
        blk = _pick_tile(S, C * 128 * itemsize, _TARGET_TILE_BYTES, align=8)
        block_shape = (1, C, blk, 128)
        index_map = lambda b, t: (b, 0, t, 0)
        n_valid = S
    else:
        # Lane-dense fallback: C on sublanes, HW on lanes.
        x = x_nchw.reshape(B, C, HW)
        blk = _pick_tile(HW, C * itemsize, _TARGET_TILE_BYTES, align=128)
        block_shape = (1, C, blk)
        index_map = lambda b, t: (b, 0, t)
        n_valid = HW
    n_t = pl.cdiv(n_valid, blk)

    # TODO(synk): when B == 1 on v7x (2 TensorCores), additionally split the
    # spatial reduction over a leading "parallel" grid axis and combine the two
    # partial sum/max pairs in the epilogue so both cores stream HBM.

    kernel = functools.partial(_cab_kernel, n_valid=n_valid, blk=blk,
                               inv_hw=1.0 / HW)

    w1_item = jnp.dtype(w_fc1.dtype).itemsize
    w2_item = jnp.dtype(w_fc2.dtype).itemsize

    out = pl.pallas_call(
        kernel,
        out_shape=jax.ShapeDtypeStruct((B, 1, C_out), x_nchw.dtype),
        grid_spec=pltpu.PrefetchScalarGridSpec(
            num_scalar_prefetch=0,
            grid=(B, n_t),                                 # reduction axis last
            in_specs=[
                pl.BlockSpec(block_shape, index_map),
                pl.BlockSpec((R, C), lambda b, t: (0, 0)),       # resident weight
                pl.BlockSpec((C_out, R), lambda b, t: (0, 0)),   # resident weight
            ],
            out_specs=pl.BlockSpec((1, 1, C_out), lambda b, t: (b, 0, 0)),
            scratch_shapes=[pltpu.VMEM((1, C), jnp.float32),
                            pltpu.VMEM((1, C), jnp.float32)],
        ),
        compiler_params=pltpu.CompilerParams(
            dimension_semantics=("parallel", "arbitrary"),
            vmem_limit_bytes=_VMEM_LIMIT_BYTES,
        ),
        cost_estimate=pl.CostEstimate(
            flops=2 * B * C * HW + 4 * B * C * R + 2 * B * C_out * R,
            transcendentals=B * C_out,
            bytes_accessed=(int(x.size) * itemsize
                            + int(w_fc1.size) * w1_item
                            + int(w_fc2.size) * w2_item
                            + B * C_out * itemsize),
        ),
    )(x, w_fc1, w_fc2)

    return out.reshape(B, C_out, 1, 1)


def cab_reference(x_nchw, w_fc1, w_fc2):
    """Pure-JAX reference mirroring the PyTorch forward."""
    avg = jnp.mean(x_nchw, axis=(2, 3))                    # (B, C)
    mx = jnp.max(x_nchw, axis=(2, 3))                      # (B, C)

    def mlp(v):
        h = jnp.maximum(v @ w_fc1.T, 0.0)                  # (B, R)
        return h @ w_fc2.T                                 # (B, C_out)

    out = jax.nn.sigmoid(mlp(avg) + mlp(mx))
    return out[:, :, None, None]


if __name__ == "__main__":
    # CAB(in_channels=4, ratio=16): ratio clamps to 4 -> reduced_channels = 1,
    # out_channels = in_channels = 4.
    B, C, H, W = 2, 4, 16, 16
    ratio = 16
    if C < ratio:
        ratio = C
    R = C // ratio
    C_out = C

    key = jax.random.PRNGKey(0)
    kx, k1, k2 = jax.random.split(key, 3)

    x = jax.random.normal(kx, (B, C, H, W), dtype=jnp.float32)
    # init scheme 'normal': weight ~ N(0, 0.02), 1x1 convs with no bias
    w_fc1 = 0.02 * jax.random.normal(k1, (R, C), dtype=jnp.float32)      # fc1: C -> R
    w_fc2 = 0.02 * jax.random.normal(k2, (C_out, R), dtype=jnp.float32)  # fc2: R -> C_out

    out = cab_forward(x, w_fc1, w_fc2)
    jax.block_until_ready(out)

    ref = cab_reference(x, w_fc1, w_fc2)
    assert out.shape == (B, C_out, 1, 1), out.shape
    err = float(jnp.max(jnp.abs(out - ref)))
    assert err < 1e-5, err

    print("KERNEL_OK")
</pallas_src>

<mosaic_0001>
module attributes {stable_mosaic.version = 11 : i64} {
  func.func @_cab_kernel(%arg0: i32, %arg1: i32, %arg2: memref<1x4x2x128xf32, #tpu.memory_space<vmem>>, %arg3: memref<1x4xf32, #tpu.memory_space<vmem>>, %arg4: memref<4x1xf32, #tpu.memory_space<vmem>>, %arg5: memref<1x1x4xf32, #tpu.memory_space<vmem>>, %arg6: memref<1x4xf32, #tpu.memory_space<vmem>>, %arg7: memref<1x4xf32, #tpu.memory_space<vmem>>) attributes {dimension_semantics = [#tpu.dimension_semantics<parallel>, #tpu.dimension_semantics<arbitrary>], iteration_bounds = array<i64: 2, 1>, scalar_prefetch = 0 : i64, scratch_operands = 2 : i64, tpu.core_type = #tpu.core_type<tc>, window_params = [{transform_indices = @transform_0, window_bounds = array<i64: 1, 4, 2, 128>}, {pipeline_mode = #tpu.pipeline_mode<synchronous>, transform_indices = @transform_1, window_bounds = array<i64: 1, 4>}, {pipeline_mode = #tpu.pipeline_mode<synchronous>, transform_indices = @transform_2, window_bounds = array<i64: 4, 1>}, {transform_indices = @transform_3, window_bounds = array<i64: 1, 1, 4>}]} {
    %c0 = arith.constant 0 : index
    %c0_0 = arith.constant 0 : index
    %c0_1 = arith.constant 0 : index
    %c0_2 = arith.constant 0 : index
    %0 = vector.load %arg2[%c0, %c0_0, %c0_1, %c0_2] : memref<1x4x2x128xf32, #tpu.memory_space<vmem>>, vector<1x4x2x128xf32>
    %1 = vector.shape_cast %0 : vector<1x4x2x128xf32> to vector<4x2x128xf32>
    %cst = arith.constant dense<0.000000e+00> : vector<4x2xf32>
    %2 = vector.multi_reduction <add>, %1, %cst [2] : vector<4x2x128xf32> to vector<4x2xf32>
    %cst_3 = arith.constant dense<0xFF800000> : vector<4x2xf32>
    %3 = vector.multi_reduction <maximumf>, %1, %cst_3 [2] : vector<4x2x128xf32> to vector<4x2xf32>
    %cst_4 = arith.constant dense<0.000000e+00> : vector<4xf32>
    %4 = vector.multi_reduction <add>, %2, %cst_4 [1] : vector<4x2xf32> to vector<4xf32>
    %cst_5 = arith.constant dense<0xFF800000> : vector<4xf32>
    %5 = vector.multi_reduction <maximumf>, %3, %cst_5 [1] : vector<4x2xf32> to vector<4xf32>
    %6 = vector.shape_cast %4 : vector<4xf32> to vector<1x4xf32>
    %7 = vector.shape_cast %5 : vector<4xf32> to vector<1x4xf32>
    %c0_i32 = arith.constant 0 : i32
    %8 = arith.cmpi eq, %arg1, %c0_i32 : i32
    %9 = arith.extui %8 : i1 to i32
    %c0_i32_6 = arith.constant 0 : i32
    %10 = arith.cmpi ne, %9, %c0_i32_6 : i32
    scf.if %10 {
      %c0_11 = arith.constant 0 : index
      %c0_12 = arith.constant 0 : index
      %17 = vector.load %arg6[%c0_11, %c0_12] : memref<1x4xf32, #tpu.memory_space<vmem>>, vector<1x4xf32>
      tpu.vector_store %arg6[%c0_11, %c0_12], %6 {strides = array<i32>} : memref<1x4xf32, #tpu.memory_space<vmem>>, vector<1x4xf32>,
      %c0_13 = arith.constant 0 : index
      %c0_14 = arith.constant 0 : index
      %18 = vector.load %arg7[%c0_13, %c0_14] : memref<1x4xf32, #tpu.memory_space<vmem>>, vector<1x4xf32>
      tpu.vector_store %arg7[%c0_13, %c0_14], %7 {strides = array<i32>} : memref<1x4xf32, #tpu.memory_space<vmem>>, vector<1x4xf32>,
    } else {
    }
    %c0_i32_7 = arith.constant 0 : i32
    %11 = arith.cmpi sgt, %arg1, %c0_i32_7 : i32
    %12 = arith.extui %11 : i1 to i32
    %c0_i32_8 = arith.constant 0 : i32
    %13 = arith.cmpi ne, %12, %c0_i32_8 : i32
    scf.if %13 {
      %c0_11 = arith.constant 0 : index
      %c0_12 = arith.constant 0 : index
      %17 = vector.load %arg6[%c0_11, %c0_12] : memref<1x4xf32, #tpu.memory_space<vmem>>, vector<1x4xf32>
      %18 = arith.addf %17, %6 : vector<1x4xf32>
      %c0_13 = arith.constant 0 : index
      %c0_14 = arith.constant 0 : index
      %19 = vector.load %arg6[%c0_13, %c0_14] : memref<1x4xf32, #tpu.memory_space<vmem>>, vector<1x4xf32>
      tpu.vector_store %arg6[%c0_13, %c0_14], %18 {strides = array<i32>} : memref<1x4xf32, #tpu.memory_space<vmem>>, vector<1x4xf32>,
      %c0_15 = arith.constant 0 : index
      %c0_16 = arith.constant 0 : index
      %20 = vector.load %arg7[%c0_15, %c0_16] : memref<1x4xf32, #tpu.memory_space<vmem>>, vector<1x4xf32>
      %21 = arith.maximumf %20, %7 : vector<1x4xf32>
      %c0_17 = arith.constant 0 : index
      %c0_18 = arith.constant 0 : index
      %22 = vector.load %arg7[%c0_17, %c0_18] : memref<1x4xf32, #tpu.memory_space<vmem>>, vector<1x4xf32>
      tpu.vector_store %arg7[%c0_17, %c0_18], %21 {strides = array<i32>} : memref<1x4xf32, #tpu.memory_space<vmem>>, vector<1x4xf32>,
    } else {
    }
    %c0_i32_9 = arith.constant 0 : i32
    %14 = arith.cmpi eq, %arg1, %c0_i32_9 : i32
    %15 = arith.extui %14 : i1 to i32
    %c0_i32_10 = arith.constant 0 : i32
    %16 = arith.cmpi ne, %15, %c0_i32_10 : i32
    scf.if %16 {
      %c0_11 = arith.constant 0 : index
      %c0_12 = arith.constant 0 : index
      %17 = vector.load %arg6[%c0_11, %c0_12] : memref<1x4xf32, #tpu.memory_space<vmem>>, vector<1x4xf32>
      %cst_13 = arith.constant 3.906250e-03 : f32
      %18 = vector.broadcast %cst_13 : f32 to vector<1x4xf32>
      %19 = arith.mulf %17, %18 : vector<1x4xf32>
      %c0_14 = arith.constant 0 : index
      %c0_15 = arith.constant 0 : index
      %20 = vector.load %arg7[%c0_14, %c0_15] : memref<1x4xf32, #tpu.memory_space<vmem>>, vector<1x4xf32>
      %c0_16 = arith.constant 0 : index
      %c0_17 = arith.constant 0 : index
      %21 = vector.load %arg3[%c0_16, %c0_17] : memref<1x4xf32, #tpu.memory_space<vmem>>, vector<1x4xf32>
      %c0_18 = arith.constant 0 : index
      %c0_19 = arith.constant 0 : index
      %22 = vector.load %arg4[%c0_18, %c0_19] : memref<4x1xf32, #tpu.memory_space<vmem>>, vector<4x1xf32>
      %23 = arith.mulf %19, %21 : vector<1x4xf32>
      %cst_20 = arith.constant dense<0.000000e+00> : vector<1xf32>
      %24 = vector.multi_reduction <add>, %23, %cst_20 [1] : vector<1x4xf32> to vector<1xf32>
      %cst_21 = arith.constant 0.000000e+00 : f32
      %25 = vector.broadcast %cst_21 : f32 to vector<1xf32>
      %26 = arith.maximumf %24, %25 : vector<1xf32>
      %27 = arith.mulf %20, %21 : vector<1x4xf32>
      %cst_22 = arith.constant dense<0.000000e+00> : vector<1xf32>
      %28 = vector.multi_reduction <add>, %27, %cst_22 [1] : vector<1x4xf32> to vector<1xf32>
      %cst_23 = arith.constant 0.000000e+00 : f32
      %29 = vector.broadcast %cst_23 : f32 to vector<1xf32>
      %30 = arith.maximumf %28, %29 : vector<1xf32>
      %31 = arith.addf %26, %30 : vector<1xf32>
      %32 = vector.shape_cast %31 : vector<1xf32> to vector<1x1xf32>
      %33 = vector.broadcast %32 : vector<1x1xf32> to vector<4x1xf32>
      %34 = arith.mulf %22, %33 : vector<4x1xf32>
      %cst_24 = arith.constant dense<0.000000e+00> : vector<4xf32>
      %35 = vector.multi_reduction <add>, %34, %cst_24 [1] : vector<4x1xf32> to vector<4xf32>
      %36 = arith.negf %35 : vector<4xf32>
      %37 = math.exp %36 : vector<4xf32>
      %cst_25 = arith.constant 1.000000e+00 : f32
      %38 = vector.broadcast %cst_25 : f32 to vector<4xf32>
      %39 = arith.addf %38, %37 : vector<4xf32>
      %40 = arith.divf %38, %39 : vector<4xf32>
      %41 = vector.shape_cast %40 : vector<4xf32> to vector<1x1x4xf32>
      %c0_26 = arith.constant 0 : index
      %c0_27 = arith.constant 0 : index
      %c0_28 = arith.constant 0 : index
      %42 = vector.load %arg5[%c0_26, %c0_27, %c0_28] : memref<1x1x4xf32, #tpu.memory_space<vmem>>, vector<1x1x4xf32>
      tpu.vector_store %arg5[%c0_26, %c0_27, %c0_28], %41 {strides = array<i32>} : memref<1x1x4xf32, #tpu.memory_space<vmem>>, vector<1x1x4xf32>,
    } else {
    }
    return
  }
  func.func @transform_0(%arg0: i32, %arg1: i32) -> (i32, i32, i32, i32) {
    %c0_i32 = arith.constant 0 : i32
    %c0_i32_0 = arith.constant 0 : i32
    %c0_i32_1 = arith.constant 0 : i32
    return %arg0, %c0_i32, %arg1, %c0_i32_0 : i32, i32, i32, i32
  }
  func.func @transform_1(%arg0: i32, %arg1: i32) -> (i32, i32) {
    %c0_i32 = arith.constant 0 : i32
    %c0_i32_0 = arith.constant 0 : i32
    %c0_i32_1 = arith.constant 0 : i32
    return %c0_i32, %c0_i32_0 : i32, i32
  }
  func.func @transform_2(%arg0: i32, %arg1: i32) -> (i32, i32) {
    %c0_i32 = arith.constant 0 : i32
    %c0_i32_0 = arith.constant 0 : i32
    %c0_i32_1 = arith.constant 0 : i32
    return %c0_i32, %c0_i32_0 : i32, i32
  }
  func.func @transform_3(%arg0: i32, %arg1: i32) -> (i32, i32, i32) {
    %c0_i32 = arith.constant 0 : i32
    %c0_i32_0 = arith.constant 0 : i32
    %c0_i32_1 = arith.constant 0 : i32
    return %arg0, %c0_i32, %c0_i32_0 : i32, i32, i32
  }
}

</mosaic_0001>

<llo_original>
// kernel: tpu_custom_call.1
$region0: #{tpu_custom_call.1}
  #allocation0 [shape = 'u32[]', space=smem, size = 0x4, offset = 0x4, fixed_abs, tag = 'smem constant byte address 0x4 - core index']
  #allocation1 [shape = 'u32[72,128]{1,0:T(1,128)}', space=vmem, size = 0x9000, scoped, tag = 'internal scratch']
  #allocation2 [shape = 'f32[1,4]{1,0:T(1,128)}', space=vmem, size = 0x200, scoped, tag = 'scratch operand']
  #allocation3 [shape = 'f32[1,4]{1,0:T(1,128)}', space=vmem, size = 0x200, scoped, tag = 'scratch operand']
  %s0 = inlined_call_operand.hbm [shape: f32[2,4,2,128], index: 0, kind: input, shape index: {}]
  %s1 = inlined_call_operand.vmem [shape: f32[1,4], index: 1, kind: input, shape index: {}]
  %s2 = inlined_call_operand.vmem [shape: f32[4,1], index: 2, kind: input, shape index: {}]
  %s3 = inlined_call_operand.hbm [shape: f32[2,1,4], index: 3, kind: output, shape index: {}]
  %s4 = sld [smem:[#allocation0]]
  $region61: #{tpu_custom_call.1} parent=0
    _
  %s6 = ssub.s32 1, %s4
  %s7 = scalar_select 0, %s6, %s4
  $region1: #{tpu_custom_call.1} parent=0
    #allocation4 [shape = 'u8[8192]{0}', space=vmem, size = 0x2000, scoped, tag = 'input window, operand 0']
    #allocation5 [shape = 's32[2]{0}', space=sflag, size = 0x8, scoped, tag = 'scoped memory for tpu_custom_call.1']
    #allocation6 [shape = 's32[2]{0}', space=sflag, size = 0x8, scoped, tag = 'scoped memory for tpu_custom_call.1']
    #allocation7 [shape = 'u8[1024]{0}', space=vmem, size = 0x400, scoped, tag = 'output window, operand 0']
    %8 = vsyncpa [#allocation5], 0
    %s9 = scalar_lea.sflag [#allocation5], 1
    %10 = vsyncpa %s9, 0
    %11 = vsyncpa [#allocation6], 0
    %s12 = scalar_lea.sflag [#allocation6], 1
    %13 = vsyncpa %s12, 0
    loop: start=0, step=1, limit=4
    $region2: #{tpu_custom_call.1} parent=1 // loop_pre_header
      _
    $region3: #{tpu_custom_call.1} parent=1 // loop_header
      %s15 = sphi 0, %s19
      %p16 = scmp.ge.s32.totalorder %s15, 4
      %s22 = sphi 0, %s34
      %s23 = sphi 0, %s30
      %s24 = sphi 0, %s22
      %s25 = sphi 0, %s23
      %s26 = sphi 0, %s24
      %s27 = sphi 0, %s25
      %s39 = sphi 0, %s41
      %s42 = sphi 0, %s39
      %s43 = sphi 0, %s42
      %s59 = sphi 0, %s43
      %s63 = sphi 0, %s63
      %s65 = sphi 0, %s63
      %s66 = sphi 0, %s65
      %s80 = sphi 0, %s66
      %s84 = sphi 0, %s84
      %s86 = sphi 0, %s84
      %s87 = sphi 0, %s86
      %s101 = sphi 0, %s87
      %s107 = sphi 0, %s109
      %s110 = sphi 0, %s107
      %s111 = sphi 0, %s110
      %s127 = sphi 0, %s111
    $region4: #{tpu_custom_call.1} parent=1 // loop_header_branch
      %18 = sbr.rel (%p16) target = $region8
    $region5: #{tpu_custom_call.1} parent=1 // loop_body
      %s20 = ssub.s32 %s15, 1
      %s21 = ssub.s32 %s15, 2
      %s28 = sadd.s32 1, %s23
      %p29 = scmp.ge.s32.totalorder %s28, 1
      %s30 = scalar_select %p29, 0, %s28
      %s31 = sadd.s32 1, %s22
      %s32 = scalar_select %p29, %s31, %s22
      %p33 = scmp.ge.s32.totalorder %s32, 2
      %s34 = scalar_select %p33, 0, %s32
      %s35 = ssub.s32 %s22, %s34
      %s36 = ssub.s32 %s23, %s30
      %s37 = sor.u32 %s35, %s36
      %p38 = scmp.eq.s32.totalorder %s37, 0
      %s40 = sadd.s32 %s39, 1
      %s41 = scalar_select %p38, %s39, %s40
      %p44 = pneg %p38
      %p45 = scmp.eq.s32.totalorder %s15, 1
      %p46 = por %p44, %p45
      %p47 = scmp.ne.s32.totalorder %s39, %s42
      %p48 = scmp.eq.s32.totalorder %s15, 0
      %p49 = por %p47, %p48
      %p50 = scmp.ne.s32.totalorder %s39, %s42
      %p51 = scmp.eq.s32.totalorder %s20, 1
      %p52 = por %p50, %p51
      %p53 = scmp.ne.s32.totalorder %s42, %s43
      %p54 = scmp.eq.s32.totalorder %s20, 0
      %p55 = por %p53, %p54
      %p56 = scmp.ne.s32.totalorder %s42, %s43
      %p57 = scmp.eq.s32.totalorder %s21, 1
      %p58 = por %p56, %p57
      %p60 = scmp.ne.s32.totalorder %s43, %s59
      %p61 = scmp.eq.s32.totalorder %s21, 0
      %p62 = por %p60, %p61
      %s64 = sadd.s32 %s63, 1
      %p67 = scmp.eq.s32.totalorder %s15, 1
      %p68 = scmp.ne.s32.totalorder %s63, %s65
      %p69 = scmp.eq.s32.totalorder %s15, 0
      %p70 = por %p68, %p69
      %p71 = scmp.ne.s32.totalorder %s63, %s65
      %p72 = scmp.eq.s32.totalorder %s20, 1
      %p73 = por %p71, %p72
      %p74 = scmp.ne.s32.totalorder %s65, %s66
      %p75 = scmp.eq.s32.totalorder %s20, 0
      %p76 = por %p74, %p75
      %p77 = scmp.ne.s32.totalorder %s65, %s66
      %p78 = scmp.eq.s32.totalorder %s21, 1
      %p79 = por %p77, %p78
      %p81 = scmp.ne.s32.totalorder %s66, %s80
      %p82 = scmp.eq.s32.totalorder %s21, 0
      %p83 = por %p81, %p82
      %s85 = sadd.s32 %s84, 1
      %p88 = scmp.eq.s32.totalorder %s15, 1
      %p89 = scmp.ne.s32.totalorder %s84, %s86
      %p90 = scmp.eq.s32.totalorder %s15, 0
      %p91 = por %p89, %p90
      %p92 = scmp.ne.s32.totalorder %s84, %s86
      %p93 = scmp.eq.s32.totalorder %s20, 1
      %p94 = por %p92, %p93
      %p95 = scmp.ne.s32.totalorder %s86, %s87
      %p96 = scmp.eq.s32.totalorder %s20, 0
      %p97 = por %p95, %p96
      %p98 = scmp.ne.s32.totalorder %s86, %s87
      %p99 = scmp.eq.s32.totalorder %s21, 1
      %p100 = por %p98, %p99
      %p102 = scmp.ne.s32.totalorder %s87, %s101
      %p103 = scmp.eq.s32.totalorder %s21, 0
      %p104 = por %p102, %p103
      %s105 = ssub.s32 %s22, %s34
      %p106 = scmp.eq.s32.totalorder %s105, 0
      %s108 = sadd.s32 %s107, 1
      %s109 = scalar_select %p106, %s107, %s108
      %p112 = pneg %p106
      %p113 = scmp.eq.s32.totalorder %s15, 1
      %p114 = por %p112, %p113
      %p115 = scmp.ne.s32.totalorder %s107, %s110
      %p116 = scmp.eq.s32.totalorder %s15, 0
      %p117 = por %p115, %p116
      %p118 = scmp.ne.s32.totalorder %s107, %s110
      %p119 = scmp.eq.s32.totalorder %s20, 1
      %p120 = por %p118, %p119
      %p121 = scmp.ne.s32.totalorder %s110, %s111
      %p122 = scmp.eq.s32.totalorder %s20, 0
      %p123 = por %p121, %p122
      %p124 = scmp.ne.s32.totalorder %s110, %s111
      %p125 = scmp.eq.s32.totalorder %s21, 1
      %p126 = por %p124, %p125
      %p128 = scmp.ne.s32.totalorder %s111, %s127
      %p129 = scmp.eq.s32.totalorder %s21, 0
      %p130 = por %p128, %p129
      %p131 = scmp.le.s32.totalorder 1, %s15
      %p132 = scmp.lt.s32.totalorder %s15, 3
      %p133 = pnand %p131, %p132
      %p134 = pneg %p133
      // Predicated region
      $region9: #{tpu_custom_call.1} parent=5 // pred_check
        _
      $region10: #{tpu_custom_call.1} parent=5 // pred_check_branch
        %136 = sbr.rel (%p133) target = $region12
      $region11: #{tpu_custom_call.1} parent=5 // pred_region
        %s137 = ssub.s32 %s15, 1
        // Predicated region
        $region13: #{tpu_custom_call.1} parent=11 // pred_check
          %p138 = pneg %p76
        $region14: #{tpu_custom_call.1} parent=11 // pred_check_branch
          %140 = sbr.rel (%p138) target = $region16
        $region15: #{tpu_custom_call.1} parent=11 // pred_region
          _
        $region16: #{tpu_custom_call.1} parent=11 // pred_fallthru
          _
        // Predicated region
        $region17: #{tpu_custom_call.1} parent=11 // pred_check
          %p141 = pneg %p97
        $region18: #{tpu_custom_call.1} parent=11 // pred_check_branch
          %143 = sbr.rel (%p141) target = $region20
        $region19: #{tpu_custom_call.1} parent=11 // pred_region
          _
        $region20: #{tpu_custom_call.1} parent=11 // pred_fallthru
          _
      $region12: #{tpu_custom_call.1} parent=5 // pred_fallthru
        _
      %p144 = scmp.lt.s32.totalorder %s15, 2
      // Predicated region
      $region21: #{tpu_custom_call.1} parent=5 // pred_check
        %p145 = pneg %p144
      $region22: #{tpu_custom_call.1} parent=5 // pred_check_branch
        %147 = sbr.rel (%p145) target = $region24
      $region23: #{tpu_custom_call.1} parent=5 // pred_region
        // Predicated region
        $region25: #{tpu_custom_call.1} parent=23 // pred_check
          %p148 = pneg %p49
        $region26: #{tpu_custom_call.1} parent=23 // pred_check_branch
          %150 = sbr.rel (%p148) target = $region28
        $region27: #{tpu_custom_call.1} parent=23 // pred_region
          %s151 = sand.u32 %s39, 1
          %s152 = scalar_lea.sflag [#allocation5], %s151
          %s153 = sand.u32 %s39, 1
          %s154 = smul.addr %s153, 8
          %s155 = scalar_lea.vmem [#allocation4], %s154
          %157 = vsyncadd %s152, 0
          %s158 = smul.addr %s22, 4
          %s159 = sadd.s32 %s23, %s158
          %s160 = smul.addr %s159, 2
          %s161 = scalar_lea.hbm %s0, %s160
          %s162 = sshll.u32 %s161, 4
          %s163 = int_to_ptr.hbm [resolvable:$true] %s162
          %s164 = sshll.u32 %s155, 4
          %s165 = int_to_ptr.vmem [resolvable:$true] %s164
          %170 = dma.hbm_to_vmem [thread:$0]  %s163, 128, %s165, %s152, 32, 32, 2
        $region28: #{tpu_custom_call.1} parent=23 // pred_fallthru
          _
      $region24: #{tpu_custom_call.1} parent=5 // pred_fallthru
        _
      %p171 = scmp.le.s32.totalorder 1, %s15
      %p172 = scmp.lt.s32.totalorder %s15, 3
      %p173 = pnand %p171, %p172
      %p174 = pneg %p173
      // Predicated region
      $region29: #{tpu_custom_call.1} parent=5 // pred_check
        _
      $region30: #{tpu_custom_call.1} parent=5 // pred_check_branch
        %176 = sbr.rel (%p173) target = $region32
      $region31: #{tpu_custom_call.1} parent=5 // pred_region
        %s177 = ssub.s32 %s15, 1
        %s178 = sand.u32 %s42, 1
        %s179 = scalar_lea.sflag [#allocation5], %s178
        %s180 = sand.u32 %s42, 1
        %s181 = smul.addr %s180, 8
        %s182 = scalar_lea.vmem [#allocation4], %s181
        // Predicated region
        $region33: #{tpu_custom_call.1} parent=31 // pred_check
          %p183 = pneg %p55
        $region34: #{tpu_custom_call.1} parent=31 // pred_check_branch
          %185 = sbr.rel (%p183) target = $region36
        $region35: #{tpu_custom_call.1} parent=31 // pred_region
          %187 = dma.done %s179, 128
        $region36: #{tpu_custom_call.1} parent=31 // pred_fallthru
          _
        %s188 = sand.u32 %s42, 1
        %s189 = scalar_lea.sflag [#allocation5], %s188
        %s190 = sand.u32 %s42, 1
        %s191 = smul.addr %s190, 8
        %s192 = scalar_lea.vmem [#allocation4], %s191
        %p193 = pneg %p55
        %p194 = pneg %p52
        %p195 = pneg %p76
        %p196 = pneg %p73
        %p197 = pneg %p97
        %p198 = pneg %p94
        %p199 = pneg %p123
        %p200 = pneg %p120
        %s201 = sand.u32 %s110, 1
        %s202 = scalar_lea.sflag [#allocation6], %s201
        %s203 = sand.u32 %s110, 1
        %s204 = scalar_lea.vmem [#allocation7], %s203
        %v205 = vld [vmem:[%s182] sm:$0x3]
        %v206 = vld [vmem:[%s182 + $0x2] sm:$0x3]
        %v207 = vld [vmem:[%s182 + $0x4] sm:$0x3]
        %v208 = vld [vmem:[%s182 + $0x6] sm:$0x3]
        %vm209 = vcmask 1041408
        %v210 = vsel %vm209, %v205, 0.0
        %211 = vadd.xlane.f32.xlu0 %v210
        %v212 = vpop.xlane.xlu0 %211
        %v213 = vsel %vm209, %v206, 0.0
        %214 = vadd.xlane.f32.xlu0 %v213
        %v215 = vpop.xlane.xlu0 %214
        %v216 = vsel %vm209, %v207, 0.0
        %217 = vadd.xlane.f32.xlu0 %v216
        %v218 = vpop.xlane.xlu0 %217
        %v219 = vsel %vm209, %v208, 0.0
        %220 = vadd.xlane.f32.xlu0 %v219
        %v221 = vpop.xlane.xlu0 %220
        %v222 = vsel %vm209, %v205, -inf
        %223 = vmax.xlane.f32.xlu0 %v222
        %v224 = vpop.xlane.xlu0 %223
        %v225 = vsel %vm209, %v206, -inf
        %226 = vmax.xlane.f32.xlu0 %v225
        %v227 = vpop.xlane.xlu0 %226
        %v228 = vsel %vm209, %v207, -inf
        %229 = vmax.xlane.f32.xlu0 %v228
        %v230 = vpop.xlane.xlu0 %229
        %v231 = vsel %vm209, %v208, -inf
        %232 = vmax.xlane.f32.xlu0 %v231
        %v233 = vpop.xlane.xlu0 %232
        %v238 = vlaneseq
        %v239 = vand.u32 %v238, 127
        %v240 = vperm.slane %v212, %v239
        %v241 = vperm.slane %v215, %v239
        %v242 = vperm.slane %v218, %v239
        %v243 = vperm.slane %v221, %v239
        %vm244 = vcmask 1041409
        %v245 = vsel %vm244, %v241, %v240
        %vm246 = vcmask 1042434
        %v247 = vsel %vm246, %v242, %v245
        %vm248 = vcmask 1043459
        %v249 = vsel %vm248, %v243, %v247
        %vm251 = vcmask 11264
        %v252 = vsel %vm251, %v249, 0.0
        %253 = vadd.xlane.f32.xlu0 %v252
        %v254 = vpop.xlane.xlu0 %253
        %v259 = vperm.slane %v224, %v239
        %v260 = vperm.slane %v227, %v239
        %v261 = vperm.slane %v230, %v239
        %v262 = vperm.slane %v233, %v239
        %v263 = vsel %vm244, %v260, %v259
        %v264 = vsel %vm246, %v261, %v263
        %v265 = vsel %vm248, %v262, %v264
        %v267 = vsel %vm251, %v265, -inf
        %268 = vmax.xlane.f32.xlu0 %v267
        %v269 = vpop.xlane.xlu0 %268
        %p270 = scmp.eq.s32.totalorder %s25, 0
        // Predicated region
        $region37: #{tpu_custom_call.1} parent=31 // pred_check
          %p271 = pneg %p270
        $region38: #{tpu_custom_call.1} parent=31 // pred_check_branch
          %273 = sbr.rel (%p271) target = $region40
        $region39: #{tpu_custom_call.1} parent=31 // pred_region
          %v275 = vperm.slane %v254, %v239
          %vm277 = vcmask 24576
          %278 = vst.msk [vmem:[#allocation2] sm:$0x1] %vm277, %v275
          %v280 = vperm.slane %v269, %v239
          %282 = vst.msk [vmem:[#allocation3] sm:$0x1] %vm277, %v280
        $region40: #{tpu_custom_call.1} parent=31 // pred_fallthru
          _
        %p283 = scmp.gt.s32.totalorder %s25, 0
        // Predicated region
        $region41: #{tpu_custom_call.1} parent=31 // pred_check
          %p284 = pneg %p283
        $region42: #{tpu_custom_call.1} parent=31 // pred_check_branch
          %286 = sbr.rel (%p284) target = $region44
        $region43: #{tpu_custom_call.1} parent=31 // pred_region
          %v287 = vld [vmem:[#allocation2] sm:$0x1]
          %v289 = vperm.slane %v254, 0
          %v290 = vperm.slane %v254, 1
          %v291 = vperm.slane %v254, 2
          %v292 = vperm.slane %v254, 3
          %293 = vst [vmem:[#allocation1] ss:$9 sm:$0xff] %v289
          %s294 = scalar_lea.vmem [#allocation1], 1
          %295 = vst [vmem:[%s294] ss:$9 sm:$0xff] %v290
          %s296 = scalar_lea.vmem [#allocation1], 2
          %297 = vst [vmem:[%s296] ss:$9 sm:$0xff] %v291
          %s298 = scalar_lea.vmem [#allocation1], 3
          %299 = vst [vmem:[%s298] ss:$9 sm:$0xff] %v292
          %v300 = vld [vmem:[#allocation1] sm:$0xff]
          %301 = vset.pattern.permute.xlu0 0
          %302 = vperm.xlu0 %301, %v300
          %v303 = vpop.permute.xlu0 %302
          %v304 = vperm.slane %v303, %v239
          %v306 = vadd.f32 %v287, %v304
          %vm307 = vcmask 24576
          %308 = vst.msk [vmem:[#allocation2] sm:$0x1] %vm307, %v306
          %v309 = vld [vmem:[#allocation3] sm:$0x1]
          %v311 = vperm.slane %v269, 0
          %v312 = vperm.slane %v269, 1
          %v313 = vperm.slane %v269, 2
          %v314 = vperm.slane %v269, 3
          %315 = vst [vmem:[#allocation1] ss:$9 sm:$0xff] %v311
          %s316 = scalar_lea.vmem [#allocation1], 1
          %317 = vst [vmem:[%s316] ss:$9 sm:$0xff] %v312
          %s318 = scalar_lea.vmem [#allocation1], 2
          %319 = vst [vmem:[%s318] ss:$9 sm:$0xff] %v313
          %s320 = scalar_lea.vmem [#allocation1], 3
          %321 = vst [vmem:[%s320] ss:$9 sm:$0xff] %v314
          %v322 = vld [vmem:[#allocation1] sm:$0xff]
          %323 = vset.pattern.permute.xlu0 0
          %324 = vperm.xlu0 %323, %v322
          %v325 = vpop.permute.xlu0 %324
          %v326 = vperm.slane %v325, %v239
          %v328 = vmax.f32 %v309, %v326
          %329 = vst.msk [vmem:[#allocation3] sm:$0x1] %vm307, %v328
        $region44: #{tpu_custom_call.1} parent=31 // pred_fallthru
          _
        // Predicated region
        $region45: #{tpu_custom_call.1} parent=31 // pred_check
          %p330 = pneg %p270
        $region46: #{tpu_custom_call.1} parent=31 // pred_check_branch
          %332 = sbr.rel (%p330) target = $region48
        $region47: #{tpu_custom_call.1} parent=31 // pred_region
          %v333 = vld [vmem:[#allocation2] sm:$0x1]
          %v334 = vmul.f32 %v333, 0.00390625
          %v335 = vld [vmem:[#allocation3] sm:$0x1]
          %v336 = vld [vmem:[%s1] sm:$0x1]
          %v337 = vld [vmem:[%s2] sm:$0xf]
          %v338 = vmul.f32 %v334, %v336
          %vm339 = vcmask 24576
          %v340 = vsel %vm339, %v338, 0.0
          %341 = vadd.xlane.f32.xlu0 %v340
          %v342 = vpop.xlane.xlu0 %341
          %v343 = vmax.f32 %v342, 0.0
          %v344 = vmul.f32 %v335, %v336
          %v345 = vsel %vm339, %v344, 0.0
          %346 = vadd.xlane.f32.xlu0 %v345
          %v347 = vpop.xlane.xlu0 %346
          %v348 = vmax.f32 %v347, 0.0
          %v349 = vadd.f32 %v343, %v348
          %v350 = vperm.slane %v349, 0
          %v351 = vmul.f32 %v337, %v350
          %v352 = vadd.f32 %v351, 0.0
          %v353 = vxor.u32 %v352, 2147483648
          %v354 = vmul.f32 %v353, 1.442695
          %v355 = vpow.pop %v354
          %v356 = vadd.f32 %v355, 1.0
          %v357 = vrcp.pop %v356
          %v358 = vmul.f32 %v356, %v357
          %v359 = vsub.f32 1.0, %v358
          %v360 = vmul.f32 %v357, %v359
          %v361 = vadd.f32 %v357, %v360
          %vm362 = vweird.f32 %v356
          %vm363 = vweird.f32 %v357
          %vm364 = vmor %vm362, %vm363
          %v365 = vsel %vm364, %v357, %v361
          %v366 = vand.u32 2147483647, %v356
          %vm367 = vcmp.eq.f32.partialorder %v366, 8.507059e+37
          %v368 = vand.u32 %v356, 2147483648
          %v369 = vor.u32 1.1754944e-38, %v368
          %v370 = vsel %vm367, %v369, %v365
          %v371 = vmul.f32 1.0, %v370
          %373 = vset.pattern.permute.xlu0 0
          %374 = vperm.xlu0 %373, %v371
          %v375 = vpop.permute.xlu0 %374
          %v376 = vperm.slane %v375, %v239
          %378 = vst.msk [vmem:[%s204] sm:$0x1] %vm339, %v376
        $region48: #{tpu_custom_call.1} parent=31 // pred_fallthru
          _
        %s379 = sand.u32 %s110, 1
        %s380 = scalar_lea.sflag [#allocation6], %s379
        %s381 = sand.u32 %s110, 1
        %s382 = scalar_lea.vmem [#allocation7], %s381
        // Predicated region
        $region49: #{tpu_custom_call.1} parent=31 // pred_check
          %p383 = pneg %p120
        $region50: #{tpu_custom_call.1} parent=31 // pred_check_branch
          %385 = sbr.rel (%p383) target = $region52
        $region51: #{tpu_custom_call.1} parent=31 // pred_region
          %387 = vsyncadd %s380, 0
          %s388 = scalar_lea.hbm %s3, %s24
          %s390 = sshll.u32 %s382, 4
          %s391 = int_to_ptr.vmem [resolvable:$true] %s390
          %s392 = sshll.u32 %s388, 4
          %s393 = int_to_ptr.hbm [resolvable:$true] %s392
          %395 = dma.vmem_to_hbm [thread:$0]  %s391, 16, %s393, %s380
        $region52: #{tpu_custom_call.1} parent=31 // pred_fallthru
          _
      $region32: #{tpu_custom_call.1} parent=5 // pred_fallthru
        _
      %p396 = scmp.le.s32.totalorder 2, %s15
      // Predicated region
      $region53: #{tpu_custom_call.1} parent=5 // pred_check
        %p397 = pneg %p396
      $region54: #{tpu_custom_call.1} parent=5 // pred_check_branch
        %399 = sbr.rel (%p397) target = $region56
      $region55: #{tpu_custom_call.1} parent=5 // pred_region
        %s400 = ssub.s32 %s15, 2
        // Predicated region
        $region57: #{tpu_custom_call.1} parent=55 // pred_check
          %p401 = pneg %p126
        $region58: #{tpu_custom_call.1} parent=55 // pred_check_branch
          %403 = sbr.rel (%p401) target = $region60
        $region59: #{tpu_custom_call.1} parent=55 // pred_region
          %s404 = sand.u32 %s111, 1
          %s405 = scalar_lea.sflag [#allocation6], %s404
          %s406 = sand.u32 %s111, 1
          %s407 = scalar_lea.vmem [#allocation7], %s406
          %409 = dma.done %s405, 16
        $region60: #{tpu_custom_call.1} parent=55 // pred_fallthru
          _
      $region56: #{tpu_custom_call.1} parent=5 // pred_fallthru
        _
    $region6: #{tpu_custom_call.1} parent=1 // loop_footer
      %s19 = sadd.s32 1, %s15
    $region7: #{tpu_custom_call.1} parent=1 // loop_footer_branch
      %14 = sbr.rel target = $region3
    $region8: #{tpu_custom_call.1} parent=1 // loop_exit
      _
    %410 = vsyncpa [#allocation5], 1
    %s411 = scalar_lea.sflag [#allocation5], 1
    %412 = vsyncpa %s411, 1
    %413 = vsyncpa [#allocation6], 1
    %s414 = scalar_lea.sflag [#allocation6], 1
    %415 = vsyncpa %s414, 1

</llo_original>
